<compile_context>
chip_gen: v5e
topology: v5e:2x2
jax: 0.10.0
libtpu: 0.0.40
codegen_flags: <defaults>
</compile_context>

<pallas_src>
import numpy as np
import jax
import jax.numpy as jnp
from jax.experimental import pallas as pl
from jax.experimental.pallas import tpu as pltpu


# ----------------------------------------------------------------------------
# Pallas kernel: fused actor+critic MLP (4 matmuls + tanh) + critic_linear,
# two interleaved independent row chains per grid step.
# ----------------------------------------------------------------------------
def deep_mlp_kernel(x_ref, w1_ref, w234_ref, slab_ref, clb_ref, out_ref):
    # x_ref    : (tb, num_inputs)     f32   streamed per grid step
    # w1_ref   : (num_inputs, 2H)     bf16  fused layer-1 weight  (resident)
    # w234_ref : (3, 2H, 2H)          bf16  fused block-diag layers 2..4 (resident)
    # slab_ref : (8, 2H)              f32   rows 0-3: fused biases,
    #                                       row 4: clw row (actor lanes = 0) (resident)
    # clb_ref  : (1, 1)               f32   critic_linear bias, SMEM scalar
    # out_ref  : (tb, 2H)             f32   lanes [0,H)=hidden_actor,
    #                                       lanes [H,2H)=value (broadcast)
    tb = x_ref.shape[0]
    H2 = w1_ref.shape[1]
    H = H2 // 2
    half = tb // 2

    slab = slab_ref[...]                       # (8, 2H) f32, one vreg
    clw = slab[4:5, :]                         # (1, 2H), zeros on actor lanes
    clb = clb_ref[0, 0]                        # scalar (SMEM)

    w1 = w1_ref[...]                           # (num_in, 2H) bf16

    # Two independent row chains: chain B's matmul overlaps chain A's tanh.
    ha = x_ref[0:half, :].astype(jnp.bfloat16)
    hb = x_ref[half:tb, :].astype(jnp.bfloat16)

    # fused layer 1
    ya = jnp.dot(ha, w1, preferred_element_type=jnp.float32)
    yb = jnp.dot(hb, w1, preferred_element_type=jnp.float32)
    ha = jnp.tanh(ya + slab[0:1, :])
    hb = jnp.tanh(yb + slab[0:1, :])

    # fused layers 2..4: block-diagonal (2H, 2H) weights
    for i in range(3):
        w = w234_ref[i]                        # (2H, 2H) bf16
        ya = jnp.dot(ha.astype(jnp.bfloat16), w, preferred_element_type=jnp.float32)
        yb = jnp.dot(hb.astype(jnp.bfloat16), w, preferred_element_type=jnp.float32)
        ha = jnp.tanh(ya + slab[i + 1:i + 2, :])
        hb = jnp.tanh(yb + slab[i + 1:i + 2, :])

    # critic_linear: VPU multiply + XLU lane reduction (clw is zero on the
    # actor lanes, so the actor half contributes nothing); clb stays scalar.
    va = jnp.sum(ha * clw, axis=-1, keepdims=True) + clb
    vb = jnp.sum(hb * clw, axis=-1, keepdims=True) + clb

    # lane-dense packed output: actor hidden in lanes [0, H), value broadcast
    # into lanes [H, 2H); wrapper slices lane H for value.  Two unmasked
    # 128-lane-wide stores (one per chain).
    lane = jax.lax.broadcasted_iota(jnp.int32, (half, H2), 1)
    out_ref[0:half, :] = jnp.where(lane < H, ha, va).astype(out_ref.dtype)
    out_ref[half:tb, :] = jnp.where(lane < H, hb, vb).astype(out_ref.dtype)


# ----------------------------------------------------------------------------
# Parameter init (matches DeepMLPBase.__init__):
#   orthogonal_(gain=sqrt(2)) weights, constant_(0) biases.  Torch layout:
#   weights (out_features, in_features), biases (out_features,).
# ----------------------------------------------------------------------------
def orthogonal_(key, out_dim, in_dim, gain):
    rows, cols = out_dim, in_dim
    a = jax.random.normal(key, (max(rows, cols), min(rows, cols)), jnp.float32)
    q, r = jnp.linalg.qr(a)
    q = q * jnp.sign(jnp.diag(r))            # deterministic sign convention
    if rows < cols:
        q = q.T
    return gain * q[:rows, :cols]            # (out_dim, in_dim)


def make_params(key, num_inputs, hidden_size):
    gain = float(np.sqrt(2.0))
    keys = jax.random.split(key, 9)
    dims = [(num_inputs, hidden_size)] + [(hidden_size, hidden_size)] * 3

    def tower(tower_keys):
        ws, bs = [], []
        for k, (din, dout) in zip(tower_keys, dims):
            ws.append(orthogonal_(k, dout, din, gain))       # (out, in)
            bs.append(jnp.zeros((dout,), jnp.float32))
        return ws, bs

    actor_w, actor_b = tower(keys[0:4])
    critic_w, critic_b = tower(keys[4:8])
    clw = orthogonal_(keys[8], 1, hidden_size, gain)         # (1, H)
    clb = jnp.zeros((1,), jnp.float32)
    return actor_w, actor_b, critic_w, critic_b, clw, clb


# ----------------------------------------------------------------------------
# Host-side packing: 19 torch tensors -> 4 kernel operands
# ----------------------------------------------------------------------------
def pack_params(params):
    actor_w, actor_b, critic_w, critic_b, clw, clb = params
    H = actor_w[0].shape[0]
    H2 = 2 * H

    # fused layer 1 weight: (num_inputs, 2H)
    w1 = jnp.concatenate([actor_w[0].T, critic_w[0].T], axis=1).astype(jnp.bfloat16)

    # fused layers 2..4: block-diagonal (2H, 2H), actor block in lanes [0,H)
    zeros_hh = jnp.zeros((H, H), jnp.float32)
    blocks = []
    for i in range(1, 4):
        top = jnp.concatenate([actor_w[i].T, zeros_hh], axis=1)
        bot = jnp.concatenate([zeros_hh, critic_w[i].T], axis=1)
        blocks.append(jnp.concatenate([top, bot], axis=0))
    w234 = jnp.stack(blocks, axis=0).astype(jnp.bfloat16)    # (3, 2H, 2H)

    # bias / clw slab: (8, 2H) f32 (rows 5-7 unused padding to a full vreg)
    slab = jnp.zeros((8, H2), jnp.float32)
    for i in range(4):
        slab = slab.at[i].set(jnp.concatenate([actor_b[i], critic_b[i]]))
    clw_row = jnp.concatenate([jnp.zeros((H,), jnp.float32), clw[0]])
    slab = slab.at[4].set(clw_row)

    # critic_linear bias as a standalone SMEM scalar
    clb_s = clb.reshape(1, 1).astype(jnp.float32)
    return w1, w234, slab, clb_s


def _round_up(n, m):
    return ((n + m - 1) // m) * m


# ----------------------------------------------------------------------------
# Wrapper: row-tiled grid, weights VMEM-resident (constant index_maps),
# x / out streamed per grid step, grid axis parallel (megacore on v7x).
# ----------------------------------------------------------------------------
def deep_mlp_forward(x, packed, rnn_hxs, *, block_rows=256):
    w1, w234, slab, clb_s = packed
    B, num_in = x.shape
    H2 = w1.shape[1]
    H = H2 // 2

    # Row tile: multiple of 16 so each of the two interleaved chains is
    # sublane-aligned (multiple of 8 rows).  Cap at block_rows (>=128
    # recommended so the MXU row dimension is filled on v5e, 256 on v6e/v7x).
    tb = min(_round_up(block_rows, 16), _round_up(B, 16))
    Bp = _round_up(B, tb)
    if Bp != B:
        x = jnp.pad(x, ((0, Bp - B), (0, 0)))
    grid = (Bp // tb,)

    # VMEM budget (per grid step, double-buffered x/out only — weights are
    # resident): well under the 32 MiB default scoped limit on all of
    # v5e / v6e / v7x at these shapes, so no vmem_limit_bytes override needed.
    cost = pl.CostEstimate(
        flops=int(2 * Bp * (num_in * H2 + 3 * H2 * H2) + 2 * Bp * H2),
        transcendentals=int(4 * Bp * H2),
        bytes_accessed=int(x.size * 4 + w1.size * 2 + w234.size * 2
                           + slab.size * 4 + 4 + Bp * H2 * 4),
    )

    out_slab = pl.pallas_call(
        deep_mlp_kernel,
        out_shape=jax.ShapeDtypeStruct((Bp, H2), jnp.float32),
        grid=grid,
        in_specs=[
            pl.BlockSpec((tb, num_in), lambda i: (i, 0)),           # x: streamed
            pl.BlockSpec((num_in, H2), lambda i: (0, 0)),           # w1: resident
            pl.BlockSpec((3, H2, H2), lambda i: (0, 0, 0)),         # w234: resident
            pl.BlockSpec((8, H2), lambda i: (0, 0)),                # slab: resident
            pl.BlockSpec(memory_space=pltpu.MemorySpace.SMEM),      # clb: scalar
        ],
        out_specs=pl.BlockSpec((tb, H2), lambda i: (i, 0)),
        compiler_params=pltpu.CompilerParams(
            dimension_semantics=("parallel",)),
        cost_estimate=cost,
    )(x, w1, w234, slab, clb_s)

    hidden_actor = out_slab[:B, :H]
    value = out_slab[:B, H:H + 1]
    # non-recurrent: rnn_hxs passes straight through (no GRU path)
    return value, hidden_actor, rnn_hxs


# ----------------------------------------------------------------------------
# Pure-JAX reference (unfused towers; bf16 matmul inputs to match the kernel)
# ----------------------------------------------------------------------------
def reference_forward(x, params):
    actor_w, actor_b, critic_w, critic_b, clw, clb = params

    def layer(h, w, bvec):
        y = jnp.dot(h.astype(jnp.bfloat16), w.T.astype(jnp.bfloat16),
                    preferred_element_type=jnp.float32) + bvec[None, :]
        return jnp.tanh(y)

    ha = x
    for w, bvec in zip(actor_w, actor_b):
        ha = layer(ha, w, bvec)
    hc = x
    for w, bvec in zip(critic_w, critic_b):
        hc = layer(hc, w, bvec)
    value = jnp.dot(hc, clw.T) + clb[None, :]
    return value, ha


if __name__ == "__main__":
    num_inputs = 32
    hidden_size = 64

    key = jax.random.PRNGKey(0)
    k_x, k_p, k_x2 = jax.random.split(key, 3)
    params = make_params(k_p, num_inputs, hidden_size)
    packed = pack_params(params)

    # --- small batch (module-typical shapes), single grid step ---
    batch = 8
    x = jax.random.normal(k_x, (batch, num_inputs), jnp.float32)
    rnn_hxs = jnp.zeros((batch, 1), jnp.float32)     # recurrent=False -> size 1

    value, hidden_actor, rnn_hxs_out = deep_mlp_forward(x, packed, rnn_hxs)
    jax.block_until_ready((value, hidden_actor, rnn_hxs_out))

    ref_value, ref_actor = reference_forward(x, params)
    np.testing.assert_allclose(np.asarray(value), np.asarray(ref_value),
                               rtol=5e-3, atol=5e-3)
    np.testing.assert_allclose(np.asarray(hidden_actor), np.asarray(ref_actor),
                               rtol=5e-3, atol=5e-3)
    assert value.shape == (batch, 1)
    assert hidden_actor.shape == (batch, hidden_size)
    assert rnn_hxs_out.shape == rnn_hxs.shape

    # --- larger ragged batch: exercises grid > 1, padding, resident weights ---
    batch2 = 80
    x2 = jax.random.normal(k_x2, (batch2, num_inputs), jnp.float32)
    rnn_hxs2 = jnp.zeros((batch2, 1), jnp.float32)
    value2, hidden_actor2, _ = deep_mlp_forward(x2, packed, rnn_hxs2,
                                                block_rows=32)
    jax.block_until_ready((value2, hidden_actor2))
    ref_value2, ref_actor2 = reference_forward(x2, params)
    np.testing.assert_allclose(np.asarray(value2), np.asarray(ref_value2),
                               rtol=5e-3, atol=5e-3)
    np.testing.assert_allclose(np.asarray(hidden_actor2), np.asarray(ref_actor2),
                               rtol=5e-3, atol=5e-3)

    print("KERNEL_OK")
</pallas_src>

<mosaic_0001>
module attributes {stable_mosaic.version = 11 : i64} {
  func.func @deep_mlp_kernel(%arg0: i32, %arg1: memref<16x32xf32, #tpu.memory_space<vmem>>, %arg2: memref<32x128xbf16, #tpu.memory_space<vmem>>, %arg3: memref<3x128x128xbf16, #tpu.memory_space<vmem>>, %arg4: memref<8x128xf32, #tpu.memory_space<vmem>>, %arg5: memref<1x1xf32, #tpu.memory_space<smem>>, %arg6: memref<16x128xf32, #tpu.memory_space<vmem>>) attributes {dimension_semantics = [#tpu.dimension_semantics<parallel>], iteration_bounds = array<i64: 1>, scalar_prefetch = 0 : i64, scratch_operands = 0 : i64, tpu.core_type = #tpu.core_type<tc>, window_params = [{transform_indices = @transform_0, window_bounds = array<i64: 16, 32>}, {pipeline_mode = #tpu.pipeline_mode<synchronous>, transform_indices = @transform_1, window_bounds = array<i64: 32, 128>}, {pipeline_mode = #tpu.pipeline_mode<synchronous>, transform_indices = @transform_2, window_bounds = array<i64: 3, 128, 128>}, {pipeline_mode = #tpu.pipeline_mode<synchronous>, transform_indices = @transform_3, window_bounds = array<i64: 8, 128>}, {transform_indices = @transform_4, window_bounds = array<i64: 1, 1>}, {transform_indices = @transform_5, window_bounds = array<i64: 16, 128>}]} {
    %c0 = arith.constant 0 : index
    %c0_0 = arith.constant 0 : index
    %0 = vector.load %arg4[%c0, %c0_0] : memref<8x128xf32, #tpu.memory_space<vmem>>, vector<8x128xf32>
    %1 = vector.extract_strided_slice %0 {offsets = [4, 0], sizes = [1, 128], strides = [1, 1]} : vector<8x128xf32> to vector<1x128xf32>
    %c0_1 = arith.constant 0 : index
    %c0_2 = arith.constant 0 : index
    %2 = memref.load %arg5[%c0_1, %c0_2] : memref<1x1xf32, #tpu.memory_space<smem>>
    %c0_3 = arith.constant 0 : index
    %c0_4 = arith.constant 0 : index
    %3 = vector.load %arg2[%c0_3, %c0_4] : memref<32x128xbf16, #tpu.memory_space<vmem>>, vector<32x128xbf16>
    %c0_5 = arith.constant 0 : index
    %c0_6 = arith.constant 0 : index
    %4 = vector.load %arg1[%c0_5, %c0_6] : memref<16x32xf32, #tpu.memory_space<vmem>>, vector<8x32xf32>
    %5 = arith.truncf %4 : vector<8x32xf32> to vector<8x32xbf16>
    %c8 = arith.constant 8 : index
    %c0_7 = arith.constant 0 : index
    %6 = vector.load %arg1[%c8, %c0_7] : memref<16x32xf32, #tpu.memory_space<vmem>>, vector<8x32xf32>
    %7 = arith.truncf %6 : vector<8x32xf32> to vector<8x32xbf16>
    %cst = arith.constant dense<0.000000e+00> : vector<8x128xf32>
    %8 = tpu.matmul %5, %3, %cst {dimension_numbers = #tpu.dot_dimension_numbers<[1], [0], [0], [1], [0, 0, 1, 1], [], []>} : vector<8x32xbf16>, vector<32x128xbf16>, vector<8x128xf32> -> vector<8x128xf32>
    %cst_8 = arith.constant dense<0.000000e+00> : vector<8x128xf32>
    %9 = tpu.matmul %7, %3, %cst_8 {dimension_numbers = #tpu.dot_dimension_numbers<[1], [0], [0], [1], [0, 0, 1, 1], [], []>} : vector<8x32xbf16>, vector<32x128xbf16>, vector<8x128xf32> -> vector<8x128xf32>
    %10 = vector.extract_strided_slice %0 {offsets = [0, 0], sizes = [1, 128], strides = [1, 1]} : vector<8x128xf32> to vector<1x128xf32>
    %11 = vector.broadcast %10 : vector<1x128xf32> to vector<8x128xf32>
    %12 = arith.addf %8, %11 : vector<8x128xf32>
    %13 = math.tanh %12 : vector<8x128xf32>
    %14 = vector.extract_strided_slice %0 {offsets = [0, 0], sizes = [1, 128], strides = [1, 1]} : vector<8x128xf32> to vector<1x128xf32>
    %15 = vector.broadcast %14 : vector<1x128xf32> to vector<8x128xf32>
    %16 = arith.addf %9, %15 : vector<8x128xf32>
    %17 = math.tanh %16 : vector<8x128xf32>
    %c0_9 = arith.constant 0 : index
    %c0_10 = arith.constant 0 : index
    %c0_11 = arith.constant 0 : index
    %18 = vector.load %arg3[%c0_9, %c0_10, %c0_11] : memref<3x128x128xbf16, #tpu.memory_space<vmem>>, vector<1x128x128xbf16>
    %19 = vector.shape_cast %18 : vector<1x128x128xbf16> to vector<128x128xbf16>
    %20 = arith.truncf %13 : vector<8x128xf32> to vector<8x128xbf16>
    %cst_12 = arith.constant dense<0.000000e+00> : vector<8x128xf32>
    %21 = tpu.matmul %20, %19, %cst_12 {dimension_numbers = #tpu.dot_dimension_numbers<[1], [0], [0], [1], [0, 0, 1, 1], [], []>} : vector<8x128xbf16>, vector<128x128xbf16>, vector<8x128xf32> -> vector<8x128xf32>
    %22 = arith.truncf %17 : vector<8x128xf32> to vector<8x128xbf16>
    %cst_13 = arith.constant dense<0.000000e+00> : vector<8x128xf32>
    %23 = tpu.matmul %22, %19, %cst_13 {dimension_numbers = #tpu.dot_dimension_numbers<[1], [0], [0], [1], [0, 0, 1, 1], [], []>} : vector<8x128xbf16>, vector<128x128xbf16>, vector<8x128xf32> -> vector<8x128xf32>
    %24 = vector.extract_strided_slice %0 {offsets = [1, 0], sizes = [1, 128], strides = [1, 1]} : vector<8x128xf32> to vector<1x128xf32>
    %25 = vector.broadcast %24 : vector<1x128xf32> to vector<8x128xf32>
    %26 = arith.addf %21, %25 : vector<8x128xf32>
    %27 = math.tanh %26 : vector<8x128xf32>
    %28 = vector.extract_strided_slice %0 {offsets = [1, 0], sizes = [1, 128], strides = [1, 1]} : vector<8x128xf32> to vector<1x128xf32>
    %29 = vector.broadcast %28 : vector<1x128xf32> to vector<8x128xf32>
    %30 = arith.addf %23, %29 : vector<8x128xf32>
    %31 = math.tanh %30 : vector<8x128xf32>
    %c1 = arith.constant 1 : index
    %c0_14 = arith.constant 0 : index
    %c0_15 = arith.constant 0 : index
    %32 = vector.load %arg3[%c1, %c0_14, %c0_15] : memref<3x128x128xbf16, #tpu.memory_space<vmem>>, vector<1x128x128xbf16>
    %33 = vector.shape_cast %32 : vector<1x128x128xbf16> to vector<128x128xbf16>
    %34 = arith.truncf %27 : vector<8x128xf32> to vector<8x128xbf16>
    %cst_16 = arith.constant dense<0.000000e+00> : vector<8x128xf32>
    %35 = tpu.matmul %34, %33, %cst_16 {dimension_numbers = #tpu.dot_dimension_numbers<[1], [0], [0], [1], [0, 0, 1, 1], [], []>} : vector<8x128xbf16>, vector<128x128xbf16>, vector<8x128xf32> -> vector<8x128xf32>
    %36 = arith.truncf %31 : vector<8x128xf32> to vector<8x128xbf16>
    %cst_17 = arith.constant dense<0.000000e+00> : vector<8x128xf32>
    %37 = tpu.matmul %36, %33, %cst_17 {dimension_numbers = #tpu.dot_dimension_numbers<[1], [0], [0], [1], [0, 0, 1, 1], [], []>} : vector<8x128xbf16>, vector<128x128xbf16>, vector<8x128xf32> -> vector<8x128xf32>
    %38 = vector.extract_strided_slice %0 {offsets = [2, 0], sizes = [1, 128], strides = [1, 1]} : vector<8x128xf32> to vector<1x128xf32>
    %39 = vector.broadcast %38 : vector<1x128xf32> to vector<8x128xf32>
    %40 = arith.addf %35, %39 : vector<8x128xf32>
    %41 = math.tanh %40 : vector<8x128xf32>
    %42 = vector.extract_strided_slice %0 {offsets = [2, 0], sizes = [1, 128], strides = [1, 1]} : vector<8x128xf32> to vector<1x128xf32>
    %43 = vector.broadcast %42 : vector<1x128xf32> to vector<8x128xf32>
    %44 = arith.addf %37, %43 : vector<8x128xf32>
    %45 = math.tanh %44 : vector<8x128xf32>
    %c2 = arith.constant 2 : index
    %c0_18 = arith.constant 0 : index
    %c0_19 = arith.constant 0 : index
    %46 = vector.load %arg3[%c2, %c0_18, %c0_19] : memref<3x128x128xbf16, #tpu.memory_space<vmem>>, vector<1x128x128xbf16>
    %47 = vector.shape_cast %46 : vector<1x128x128xbf16> to vector<128x128xbf16>
    %48 = arith.truncf %41 : vector<8x128xf32> to vector<8x128xbf16>
    %cst_20 = arith.constant dense<0.000000e+00> : vector<8x128xf32>
    %49 = tpu.matmul %48, %47, %cst_20 {dimension_numbers = #tpu.dot_dimension_numbers<[1], [0], [0], [1], [0, 0, 1, 1], [], []>} : vector<8x128xbf16>, vector<128x128xbf16>, vector<8x128xf32> -> vector<8x128xf32>
    %50 = arith.truncf %45 : vector<8x128xf32> to vector<8x128xbf16>
    %cst_21 = arith.constant dense<0.000000e+00> : vector<8x128xf32>
    %51 = tpu.matmul %50, %47, %cst_21 {dimension_numbers = #tpu.dot_dimension_numbers<[1], [0], [0], [1], [0, 0, 1, 1], [], []>} : vector<8x128xbf16>, vector<128x128xbf16>, vector<8x128xf32> -> vector<8x128xf32>
    %52 = vector.extract_strided_slice %0 {offsets = [3, 0], sizes = [1, 128], strides = [1, 1]} : vector<8x128xf32> to vector<1x128xf32>
    %53 = vector.broadcast %52 : vector<1x128xf32> to vector<8x128xf32>
    %54 = arith.addf %49, %53 : vector<8x128xf32>
    %55 = math.tanh %54 : vector<8x128xf32>
    %56 = vector.extract_strided_slice %0 {offsets = [3, 0], sizes = [1, 128], strides = [1, 1]} : vector<8x128xf32> to vector<1x128xf32>
    %57 = vector.broadcast %56 : vector<1x128xf32> to vector<8x128xf32>
    %58 = arith.addf %51, %57 : vector<8x128xf32>
    %59 = math.tanh %58 : vector<8x128xf32>
    %60 = vector.broadcast %1 : vector<1x128xf32> to vector<8x128xf32>
    %61 = arith.mulf %55, %60 : vector<8x128xf32>
    %cst_22 = arith.constant dense<0.000000e+00> : vector<8xf32>
    %62 = vector.multi_reduction <add>, %61, %cst_22 [1] : vector<8x128xf32> to vector<8xf32>
    %63 = vector.shape_cast %62 : vector<8xf32> to vector<8x1xf32>
    %64 = vector.broadcast %2 : f32 to vector<8x1xf32>
    %65 = arith.addf %63, %64 : vector<8x1xf32>
    %66 = vector.broadcast %1 : vector<1x128xf32> to vector<8x128xf32>
    %67 = arith.mulf %59, %66 : vector<8x128xf32>
    %cst_23 = arith.constant dense<0.000000e+00> : vector<8xf32>
    %68 = vector.multi_reduction <add>, %67, %cst_23 [1] : vector<8x128xf32> to vector<8xf32>
    %69 = vector.shape_cast %68 : vector<8xf32> to vector<8x1xf32>
    %70 = vector.broadcast %2 : f32 to vector<8x1xf32>
    %71 = arith.addf %69, %70 : vector<8x1xf32>
    %72 = tpu.iota {dimensions = array<i32: 1>} : vector<8x128xi32>
    %c64_i32 = arith.constant 64 : i32
    %73 = vector.broadcast %c64_i32 : i32 to vector<8x128xi32>
    %74 = arith.cmpi slt, %72, %73 : vector<8x128xi32>
    %75 = vector.shape_cast %65 : vector<8x1xf32> to vector<8x1xf32>
    %76 = vector.broadcast %75 : vector<8x1xf32> to vector<8x128xf32>
    %77 = arith.select %74, %55, %76 : vector<8x128xi1>, vector<8x128xf32>
    %c0_24 = arith.constant 0 : index
    %c0_25 = arith.constant 0 : index
    %78 = vector.load %arg6[%c0_24, %c0_25] : memref<16x128xf32, #tpu.memory_space<vmem>>, vector<8x128xf32>
    tpu.vector_store %arg6[%c0_24, %c0_25], %77 {strides = array<i32>} : memref<16x128xf32, #tpu.memory_space<vmem>>, vector<8x128xf32>,
    %c64_i32_26 = arith.constant 64 : i32
    %79 = vector.broadcast %c64_i32_26 : i32 to vector<8x128xi32>
    %80 = arith.cmpi slt, %72, %79 : vector<8x128xi32>
    %81 = vector.shape_cast %71 : vector<8x1xf32> to vector<8x1xf32>
    %82 = vector.broadcast %81 : vector<8x1xf32> to vector<8x128xf32>
    %83 = arith.select %80, %59, %82 : vector<8x128xi1>, vector<8x128xf32>
    %c8_27 = arith.constant 8 : index
    %c0_28 = arith.constant 0 : index
    %84 = vector.load %arg6[%c8_27, %c0_28] : memref<16x128xf32, #tpu.memory_space<vmem>>, vector<8x128xf32>
    tpu.vector_store %arg6[%c8_27, %c0_28], %83 {strides = array<i32>} : memref<16x128xf32, #tpu.memory_space<vmem>>, vector<8x128xf32>,
    return
  }
  func.func @transform_0(%arg0: i32) -> (i32, i32) {
    %c0_i32 = arith.constant 0 : i32
    %c0_i32_0 = arith.constant 0 : i32
    return %arg0, %c0_i32 : i32, i32
  }
  func.func @transform_1(%arg0: i32) -> (i32, i32) {
    %c0_i32 = arith.constant 0 : i32
    %c0_i32_0 = arith.constant 0 : i32
    %c0_i32_1 = arith.constant 0 : i32
    return %c0_i32, %c0_i32_0 : i32, i32
  }
  func.func @transform_2(%arg0: i32) -> (i32, i32, i32) {
    %c0_i32 = arith.constant 0 : i32
    %c0_i32_0 = arith.constant 0 : i32
    %c0_i32_1 = arith.constant 0 : i32
    %c0_i32_2 = arith.constant 0 : i32
    return %c0_i32, %c0_i32_0, %c0_i32_1 : i32, i32, i32
  }
  func.func @transform_3(%arg0: i32) -> (i32, i32) {
    %c0_i32 = arith.constant 0 : i32
    %c0_i32_0 = arith.constant 0 : i32
    %c0_i32_1 = arith.constant 0 : i32
    return %c0_i32, %c0_i32_0 : i32, i32
  }
  func.func @transform_4(%arg0: i32) -> (i32, i32) {
    %c0_i32 = arith.constant 0 : i32
    %c0_i32_0 = arith.constant 0 : i32
    %c0_i32_1 = arith.constant 0 : i32
    return %c0_i32, %c0_i32_0 : i32, i32
  }
  func.func @transform_5(%arg0: i32) -> (i32, i32) {
    %c0_i32 = arith.constant 0 : i32
    %c0_i32_0 = arith.constant 0 : i32
    return %arg0, %c0_i32 : i32, i32
  }
}

</mosaic_0001>

<llo_original>
// kernel: tpu_custom_call.1
$region0: #{tpu_custom_call.1}
  #allocation0 [shape = 'u32[]', space=smem, size = 0x4, offset = 0x4, fixed_abs, tag = 'smem constant byte address 0x4 - core index']
  #allocation1 [shape = 'u32[72,128]{1,0:T(1,128)}', space=vmem, size = 0x9000, scoped, tag = 'internal scratch']
  #allocation2 [shape = 'f32[1,1]{1,0:T(1,128)S(6)}', space=smem, size = 0x200, scoped, tag = 'scoped memory for tpu_custom_call.1']
  %s0 = inlined_call_operand.hbm [shape: f32[16,32], index: 0, kind: input, shape index: {}]
  %s1 = inlined_call_operand.hbm [shape: bf16[32,128], index: 1, kind: input, shape index: {}]
  %s2 = inlined_call_operand.hbm [shape: bf16[3,128,128], index: 2, kind: input, shape index: {}]
  %s3 = inlined_call_operand.hbm [shape: f32[8,128], index: 3, kind: input, shape index: {}]
  %s4 = inlined_call_operand.<no memory space> [shape: f32[1,1], index: 4, kind: input, shape index: {}]
  %s5 = inlined_call_operand.hbm [shape: f32[16,128], index: 5, kind: output, shape index: {}]
  %s6 = sld [smem:[#allocation0]]
  $region46: #{tpu_custom_call.1} parent=0
    _
  %s8 = ssub.s32 1, %s6
  %s9 = scalar_select 0, %s8, %s6
  %10 = sst [smem:[#allocation2]] %s4
  $region1: #{tpu_custom_call.1} parent=0
    #allocation3 [shape = 'u8[8192]{0}', space=vmem, size = 0x2000, scoped, tag = 'input window, operand 0, single buffered']
    #allocation4 [shape = 's32[1]{0}', space=sflag, size = 0x4, scoped, tag = 'scoped memory for tpu_custom_call.1']
    #allocation5 [shape = 's32[1]{0}', space=sflag, size = 0x4, scoped, tag = 'scoped memory for tpu_custom_call.1']
    #allocation6 [shape = 'u8[8192]{0}', space=vmem, size = 0x2000, scoped, tag = 'input window, operand 1, single buffered']
    #allocation7 [shape = 's32[1]{0}', space=sflag, size = 0x4, scoped, tag = 'scoped memory for tpu_custom_call.1']
    #allocation8 [shape = 'u8[98304]{0}', space=vmem, size = 0x18000, scoped, tag = 'input window, operand 2, single buffered']
    #allocation9 [shape = 'u8[4096]{0}', space=vmem, size = 0x1000, scoped, tag = 'input window, operand 3, single buffered']
    #allocation10 [shape = 's32[1]{0}', space=sflag, size = 0x4, scoped, tag = 'scoped memory for tpu_custom_call.1']
    #allocation11 [shape = 'u8[8192]{0}', space=vmem, size = 0x2000, scoped, tag = 'output window, operand 0, single buffered']
    %11 = vsyncpa [#allocation4], 0
    %12 = vsyncpa [#allocation7], 0
    %13 = vsyncpa [#allocation10], 0
    %14 = vsyncpa [#allocation5], 0
    // Predicated region
    $region2: #{tpu_custom_call.1} parent=1 // pred_check
      _
    $region3: #{tpu_custom_call.1} parent=1 // pred_check_branch
      %16 = sbr.rel (0) target = $region5
    $region4: #{tpu_custom_call.1} parent=1 // pred_region
      %18 = vsyncadd [#allocation4], 0
      %s19 = sshll.u32 %s0, 4
      %s20 = int_to_ptr.hbm [resolvable:$true] %s19
      %s21 = sshll.u32 [#allocation3], 4
      %s22 = int_to_ptr.vmem [resolvable:$true] %s21
      %27 = dma.hbm_to_vmem [thread:$0]  %s20, 256, %s22, [#allocation4], 128, 128, 8
    $region5: #{tpu_custom_call.1} parent=1 // pred_fallthru
      _
    // Predicated region
    $region6: #{tpu_custom_call.1} parent=1 // pred_check
      _
    $region7: #{tpu_custom_call.1} parent=1 // pred_check_branch
      %29 = sbr.rel (0) target = $region9
    $region8: #{tpu_custom_call.1} parent=1 // pred_region
      %31 = vsyncadd [#allocation7], 0
      %s32 = sshll.u32 %s1, 4
      %s33 = int_to_ptr.hbm [resolvable:$true] %s32
      %s34 = sshll.u32 [#allocation6], 4
      %s35 = int_to_ptr.vmem [resolvable:$true] %s34
      %40 = dma.hbm_to_vmem [thread:$0]  %s33, 256, %s35, [#allocation7], 64, 64, 4
    $region9: #{tpu_custom_call.1} parent=1 // pred_fallthru
      _
    // Predicated region
    $region10: #{tpu_custom_call.1} parent=1 // pred_check
      _
    $region11: #{tpu_custom_call.1} parent=1 // pred_check_branch
      %42 = sbr.rel (0) target = $region13
    $region12: #{tpu_custom_call.1} parent=1 // pred_region
      %44 = vsyncadd [#allocation7], 0
      %s45 = sshll.u32 %s2, 4
      %s46 = int_to_ptr.hbm [resolvable:$true] %s45
      %s47 = sshll.u32 [#allocation8], 4
      %s48 = int_to_ptr.vmem [resolvable:$true] %s47
      %53 = dma.hbm_to_vmem [thread:$0]  %s46, 3072, %s48, [#allocation7], 64, 64, 4
    $region13: #{tpu_custom_call.1} parent=1 // pred_fallthru
      _
    // Predicated region
    $region14: #{tpu_custom_call.1} parent=1 // pred_check
      _
    $region15: #{tpu_custom_call.1} parent=1 // pred_check_branch
      %55 = sbr.rel (0) target = $region17
    $region16: #{tpu_custom_call.1} parent=1 // pred_region
      %57 = vsyncadd [#allocation10], 0
      %s59 = sshll.u32 %s3, 4
      %s60 = int_to_ptr.hbm [resolvable:$true] %s59
      %s61 = sshll.u32 [#allocation9], 4
      %s62 = int_to_ptr.vmem [resolvable:$true] %s61
      %64 = dma.hbm_to_vmem [thread:$0]  %s60, 128, %s62, [#allocation10]
    $region17: #{tpu_custom_call.1} parent=1 // pred_fallthru
      _
    // Predicated region
    $region18: #{tpu_custom_call.1} parent=1 // pred_check
      _
    $region19: #{tpu_custom_call.1} parent=1 // pred_check_branch
      %66 = sbr.rel (0) target = $region21
    $region20: #{tpu_custom_call.1} parent=1 // pred_region
      _
    $region21: #{tpu_custom_call.1} parent=1 // pred_fallthru
      _
    // Predicated region
    $region22: #{tpu_custom_call.1} parent=1 // pred_check
      _
    $region23: #{tpu_custom_call.1} parent=1 // pred_check_branch
      %68 = sbr.rel (0) target = $region25
    $region24: #{tpu_custom_call.1} parent=1 // pred_region
      %70 = dma.done [#allocation4], 256
    $region25: #{tpu_custom_call.1} parent=1 // pred_fallthru
      _
    // Predicated region
    $region26: #{tpu_custom_call.1} parent=1 // pred_check
      _
    $region27: #{tpu_custom_call.1} parent=1 // pred_check_branch
      %72 = sbr.rel (0) target = $region29
    $region28: #{tpu_custom_call.1} parent=1 // pred_region
      %74 = dma.done [#allocation7], 256
    $region29: #{tpu_custom_call.1} parent=1 // pred_fallthru
      _
    // Predicated region
    $region30: #{tpu_custom_call.1} parent=1 // pred_check
      _
    $region31: #{tpu_custom_call.1} parent=1 // pred_check_branch
      %76 = sbr.rel (0) target = $region33
    $region32: #{tpu_custom_call.1} parent=1 // pred_region
      %78 = dma.done [#allocation7], 3072
    $region33: #{tpu_custom_call.1} parent=1 // pred_fallthru
      _
    // Predicated region
    $region34: #{tpu_custom_call.1} parent=1 // pred_check
      _
    $region35: #{tpu_custom_call.1} parent=1 // pred_check_branch
      %80 = sbr.rel (0) target = $region37
    $region36: #{tpu_custom_call.1} parent=1 // pred_region
      %82 = dma.done [#allocation10], 128
    $region37: #{tpu_custom_call.1} parent=1 // pred_fallthru
      _
    %v84 = vld [vmem:[#allocation9] sm:$0xff]
    %s85 = sld [smem:[#allocation2]]
    %v86 = vld [vmem:[#allocation6] sm:$0xf]
    %v87 = vld [vmem:[#allocation6 + $0x4] sm:$0xf]
    %v88 = vld [vmem:[#allocation6 + $0x8] sm:$0xf]
    %v89 = vld [vmem:[#allocation6 + $0xc] sm:$0xf]
    %v90 = vld [vmem:[#allocation3] sm:$0xff]
    %v91 = vpack.c.bf16 %v90, %v90
    %v92 = vld [vmem:[#allocation3 + $0x8] sm:$0xff]
    %v93 = vpack.c.bf16 %v92, %v92
    %v94 = vperm.slane %v84, 0
    %v99 = vunpack.c.l.b16 %v86
    %v100 = vunpack.c.l.b16 %v87
    %v101 = vunpack.c.l.b16 %v88
    %v102 = vunpack.c.l.b16 %v89
    %v103 = vpack.c.b16 %v100, %v99
    %v104 = vpack.c.b16 %v102, %v101
    %vm107 = vcmask 261120
    %v109 = vsel %vm107, %v91, 0
    %111 = vmatpush.bf16.msra.mxu0 0
    %112 = vmatpush.bf16.msra.mxu0 0
    %113 = vmatpush.bf16.msra.mxu0 0
    %114 = vmatpush.bf16.msra.mxu0 0
    %115 = vmatpush.bf16.msra.mxu0 0
    %116 = vmatpush.bf16.msra.mxu0 0
    %117 = vmatpush.bf16.msra.mxu0 %v104
    %118 = vmatpush.bf16.msra.mxu0 %v103
    %119 = vmatmul.bf16.gmra.mxu0 %v109
    %v120 = vpop.f32.mrf.mxu0
    %v121 = vadd.f32 %v94, %v120
    %v122 = vpop.f32.mrf.mxu0
    %123 = vdwg.mxu0
    %v124 = vtanh.pop %v121
    %v126 = vsel %vm107, %v93, 0
    %128 = vmatpush.bf16.msra.mxu0 0
    %129 = vmatpush.bf16.msra.mxu0 0
    %130 = vmatpush.bf16.msra.mxu0 0
    %131 = vmatpush.bf16.msra.mxu0 0
    %132 = vmatpush.bf16.msra.mxu0 0
    %133 = vmatpush.bf16.msra.mxu0 0
    %134 = vmatpush.bf16.msra.mxu0 %v104
    %135 = vmatpush.bf16.msra.mxu0 %v103
    %136 = vmatmul.bf16.gmra.mxu0 %v126
    %v137 = vpop.f32.mrf.mxu0
    %v138 = vadd.f32 %v94, %v137
    %v139 = vpop.f32.mrf.mxu0
    %140 = vdwg.mxu0
    %v141 = vtanh.pop %v138
    %v142 = vld [vmem:[#allocation8] sm:$0xf]
    %v143 = vld [vmem:[#allocation8 + $0x4] sm:$0xf]
    %v144 = vld [vmem:[#allocation8 + $0x8] sm:$0xf]
    %v145 = vld [vmem:[#allocation8 + $0xc] sm:$0xf]
    %v146 = vld [vmem:[#allocation8 + $0x10] sm:$0xf]
    %v147 = vld [vmem:[#allocation8 + $0x14] sm:$0xf]
    %v148 = vld [vmem:[#allocation8 + $0x18] sm:$0xf]
    %v149 = vld [vmem:[#allocation8 + $0x1c] sm:$0xf]
    %v150 = vld [vmem:[#allocation8 + $0x20] sm:$0xf]
    %v151 = vld [vmem:[#allocation8 + $0x24] sm:$0xf]
    %v152 = vld [vmem:[#allocation8 + $0x28] sm:$0xf]
    %v153 = vld [vmem:[#allocation8 + $0x2c] sm:$0xf]
    %v154 = vld [vmem:[#allocation8 + $0x30] sm:$0xf]
    %v155 = vld [vmem:[#allocation8 + $0x34] sm:$0xf]
    %v156 = vld [vmem:[#allocation8 + $0x38] sm:$0xf]
    %v157 = vld [vmem:[#allocation8 + $0x3c] sm:$0xf]
    %v158 = vpack.c.bf16 %v124, %v124
    %v159 = vpack.c.bf16 %v141, %v141
    %v160 = vperm.slane %v84, 1
    %v177 = vunpack.c.l.b16 %v142
    %v178 = vunpack.c.l.b16 %v143
    %v179 = vunpack.c.l.b16 %v144
    %v180 = vunpack.c.l.b16 %v145
    %v181 = vunpack.c.l.b16 %v146
    %v182 = vunpack.c.l.b16 %v147
    %v183 = vunpack.c.l.b16 %v148
    %v184 = vunpack.c.l.b16 %v149
    %v185 = vunpack.c.l.b16 %v150
    %v186 = vunpack.c.l.b16 %v151
    %v187 = vunpack.c.l.b16 %v152
    %v188 = vunpack.c.l.b16 %v153
    %v189 = vunpack.c.l.b16 %v154
    %v190 = vunpack.c.l.b16 %v155
    %v191 = vunpack.c.l.b16 %v156
    %v192 = vunpack.c.l.b16 %v157
    %v193 = vpack.c.b16 %v178, %v177
    %v194 = vpack.c.b16 %v180, %v179
    %v195 = vpack.c.b16 %v182, %v181
    %v196 = vpack.c.b16 %v184, %v183
    %v197 = vpack.c.b16 %v186, %v185
    %v198 = vpack.c.b16 %v188, %v187
    %v199 = vpack.c.b16 %v190, %v189
    %v200 = vpack.c.b16 %v192, %v191
    %209 = vmatpush.bf16.msra.mxu0 %v200
    %210 = vmatpush.bf16.msra.mxu0 %v199
    %211 = vmatpush.bf16.msra.mxu0 %v198
    %212 = vmatpush.bf16.msra.mxu0 %v197
    %213 = vmatpush.bf16.msra.mxu0 %v196
    %214 = vmatpush.bf16.msra.mxu0 %v195
    %215 = vmatpush.bf16.msra.mxu0 %v194
    %216 = vmatpush.bf16.msra.mxu0 %v193
    %217 = vmatmul.bf16.gmra.mxu0 %v158
    %v218 = vpop.f32.mrf.mxu0
    %v219 = vadd.f32 %v160, %v218
    %v220 = vpop.f32.mrf.mxu0
    %221 = vdwg.mxu0
    %v222 = vtanh.pop %v219
    %223 = vmatpush.bf16.msra.mxu0 %v200
    %224 = vmatpush.bf16.msra.mxu0 %v199
    %225 = vmatpush.bf16.msra.mxu0 %v198
    %226 = vmatpush.bf16.msra.mxu0 %v197
    %227 = vmatpush.bf16.msra.mxu0 %v196
    %228 = vmatpush.bf16.msra.mxu0 %v195
    %229 = vmatpush.bf16.msra.mxu0 %v194
    %230 = vmatpush.bf16.msra.mxu0 %v193
    %231 = vmatmul.bf16.gmra.mxu0 %v159
    %v232 = vpop.f32.mrf.mxu0
    %v233 = vadd.f32 %v160, %v232
    %v234 = vpop.f32.mrf.mxu0
    %235 = vdwg.mxu0
    %v236 = vtanh.pop %v233
    %s237 = scalar_lea.vmem [#allocation8], 64
    %v238 = vld [vmem:[%s237] sm:$0xf]
    %v239 = vld [vmem:[%s237 + $0x4] sm:$0xf]
    %v240 = vld [vmem:[%s237 + $0x8] sm:$0xf]
    %v241 = vld [vmem:[%s237 + $0xc] sm:$0xf]
    %v242 = vld [vmem:[%s237 + $0x10] sm:$0xf]
    %v243 = vld [vmem:[%s237 + $0x14] sm:$0xf]
    %v244 = vld [vmem:[%s237 + $0x18] sm:$0xf]
    %v245 = vld [vmem:[%s237 + $0x1c] sm:$0xf]
    %v246 = vld [vmem:[%s237 + $0x20] sm:$0xf]
    %v247 = vld [vmem:[%s237 + $0x24] sm:$0xf]
    %v248 = vld [vmem:[%s237 + $0x28] sm:$0xf]
    %v249 = vld [vmem:[%s237 + $0x2c] sm:$0xf]
    %v250 = vld [vmem:[%s237 + $0x30] sm:$0xf]
    %v251 = vld [vmem:[%s237 + $0x34] sm:$0xf]
    %v252 = vld [vmem:[%s237 + $0x38] sm:$0xf]
    %v253 = vld [vmem:[%s237 + $0x3c] sm:$0xf]
    %v254 = vpack.c.bf16 %v222, %v222
    %v255 = vpack.c.bf16 %v236, %v236
    %v256 = vperm.slane %v84, 2
    %v273 = vunpack.c.l.b16 %v238
    %v274 = vunpack.c.l.b16 %v239
    %v275 = vunpack.c.l.b16 %v240
    %v276 = vunpack.c.l.b16 %v241
    %v277 = vunpack.c.l.b16 %v242
    %v278 = vunpack.c.l.b16 %v243
    %v279 = vunpack.c.l.b16 %v244
    %v280 = vunpack.c.l.b16 %v245
    %v281 = vunpack.c.l.b16 %v246
    %v282 = vunpack.c.l.b16 %v247
    %v283 = vunpack.c.l.b16 %v248
    %v284 = vunpack.c.l.b16 %v249
    %v285 = vunpack.c.l.b16 %v250
    %v286 = vunpack.c.l.b16 %v251
    %v287 = vunpack.c.l.b16 %v252
    %v288 = vunpack.c.l.b16 %v253
    %v289 = vpack.c.b16 %v274, %v273
    %v290 = vpack.c.b16 %v276, %v275
    %v291 = vpack.c.b16 %v278, %v277
    %v292 = vpack.c.b16 %v280, %v279
    %v293 = vpack.c.b16 %v282, %v281
    %v294 = vpack.c.b16 %v284, %v283
    %v295 = vpack.c.b16 %v286, %v285
    %v296 = vpack.c.b16 %v288, %v287
    %305 = vmatpush.bf16.msra.mxu0 %v296
    %306 = vmatpush.bf16.msra.mxu0 %v295
    %307 = vmatpush.bf16.msra.mxu0 %v294
    %308 = vmatpush.bf16.msra.mxu0 %v293
    %309 = vmatpush.bf16.msra.mxu0 %v292
    %310 = vmatpush.bf16.msra.mxu0 %v291
    %311 = vmatpush.bf16.msra.mxu0 %v290
    %312 = vmatpush.bf16.msra.mxu0 %v289
    %313 = vmatmul.bf16.gmra.mxu0 %v254
    %v314 = vpop.f32.mrf.mxu0
    %v315 = vadd.f32 %v256, %v314
    %v316 = vpop.f32.mrf.mxu0
    %317 = vdwg.mxu0
    %v318 = vtanh.pop %v315
    %319 = vmatpush.bf16.msra.mxu0 %v296
    %320 = vmatpush.bf16.msra.mxu0 %v295
    %321 = vmatpush.bf16.msra.mxu0 %v294
    %322 = vmatpush.bf16.msra.mxu0 %v293
    %323 = vmatpush.bf16.msra.mxu0 %v292
    %324 = vmatpush.bf16.msra.mxu0 %v291
    %325 = vmatpush.bf16.msra.mxu0 %v290
    %326 = vmatpush.bf16.msra.mxu0 %v289
    %327 = vmatmul.bf16.gmra.mxu0 %v255
    %v328 = vpop.f32.mrf.mxu0
    %v329 = vadd.f32 %v256, %v328
    %v330 = vpop.f32.mrf.mxu0
    %331 = vdwg.mxu0
    %v332 = vtanh.pop %v329
    %s333 = scalar_lea.vmem [#allocation8], 128
    %v334 = vld [vmem:[%s333] sm:$0xf]
    %v335 = vld [vmem:[%s333 + $0x4] sm:$0xf]
    %v336 = vld [vmem:[%s333 + $0x8] sm:$0xf]
    %v337 = vld [vmem:[%s333 + $0xc] sm:$0xf]
    %v338 = vld [vmem:[%s333 + $0x10] sm:$0xf]
    %v339 = vld [vmem:[%s333 + $0x14] sm:$0xf]
    %v340 = vld [vmem:[%s333 + $0x18] sm:$0xf]
    %v341 = vld [vmem:[%s333 + $0x1c] sm:$0xf]
    %v342 = vld [vmem:[%s333 + $0x20] sm:$0xf]
    %v343 = vld [vmem:[%s333 + $0x24] sm:$0xf]
    %v344 = vld [vmem:[%s333 + $0x28] sm:$0xf]
    %v345 = vld [vmem:[%s333 + $0x2c] sm:$0xf]
    %v346 = vld [vmem:[%s333 + $0x30] sm:$0xf]
    %v347 = vld [vmem:[%s333 + $0x34] sm:$0xf]
    %v348 = vld [vmem:[%s333 + $0x38] sm:$0xf]
    %v349 = vld [vmem:[%s333 + $0x3c] sm:$0xf]
    %v350 = vpack.c.bf16 %v318, %v318
    %v351 = vpack.c.bf16 %v332, %v332
    %v352 = vperm.slane %v84, 3
    %v369 = vunpack.c.l.b16 %v334
    %v370 = vunpack.c.l.b16 %v335
    %v371 = vunpack.c.l.b16 %v336
    %v372 = vunpack.c.l.b16 %v337
    %v373 = vunpack.c.l.b16 %v338
    %v374 = vunpack.c.l.b16 %v339
    %v375 = vunpack.c.l.b16 %v340
    %v376 = vunpack.c.l.b16 %v341
    %v377 = vunpack.c.l.b16 %v342
    %v378 = vunpack.c.l.b16 %v343
    %v379 = vunpack.c.l.b16 %v344
    %v380 = vunpack.c.l.b16 %v345
    %v381 = vunpack.c.l.b16 %v346
    %v382 = vunpack.c.l.b16 %v347
    %v383 = vunpack.c.l.b16 %v348
    %v384 = vunpack.c.l.b16 %v349
    %v385 = vpack.c.b16 %v370, %v369
    %v386 = vpack.c.b16 %v372, %v371
    %v387 = vpack.c.b16 %v374, %v373
    %v388 = vpack.c.b16 %v376, %v375
    %v389 = vpack.c.b16 %v378, %v377
    %v390 = vpack.c.b16 %v380, %v379
    %v391 = vpack.c.b16 %v382, %v381
    %v392 = vpack.c.b16 %v384, %v383
    %401 = vmatpush.bf16.msra.mxu0 %v392
    %402 = vmatpush.bf16.msra.mxu0 %v391
    %403 = vmatpush.bf16.msra.mxu0 %v390
    %404 = vmatpush.bf16.msra.mxu0 %v389
    %405 = vmatpush.bf16.msra.mxu0 %v388
    %406 = vmatpush.bf16.msra.mxu0 %v387
    %407 = vmatpush.bf16.msra.mxu0 %v386
    %408 = vmatpush.bf16.msra.mxu0 %v385
    %409 = vmatmul.bf16.gmra.mxu0 %v350
    %v410 = vpop.f32.mrf.mxu0
    %v411 = vadd.f32 %v352, %v410
    %v412 = vpop.f32.mrf.mxu0
    %413 = vdwg.mxu0
    %v414 = vtanh.pop %v411
    %415 = vmatpush.bf16.msra.mxu0 %v392
    %416 = vmatpush.bf16.msra.mxu0 %v391
    %417 = vmatpush.bf16.msra.mxu0 %v390
    %418 = vmatpush.bf16.msra.mxu0 %v389
    %419 = vmatpush.bf16.msra.mxu0 %v388
    %420 = vmatpush.bf16.msra.mxu0 %v387
    %421 = vmatpush.bf16.msra.mxu0 %v386
    %422 = vmatpush.bf16.msra.mxu0 %v385
    %423 = vmatmul.bf16.gmra.mxu0 %v351
    %v424 = vpop.f32.mrf.mxu0
    %v425 = vadd.f32 %v352, %v424
    %v426 = vpop.f32.mrf.mxu0
    %427 = vdwg.mxu0
    %v428 = vtanh.pop %v425
    %v429 = vperm.slane %v84, 4
    %v430 = vmul.f32 %v414, %v429
    %431 = vadd.xlane.f32.xlu0 %v430
    %v432 = vpop.xlane.xlu0 %431
    %v433 = vstv %s85
    %v434 = vadd.f32 %v432, %v433
    %v435 = vmul.f32 %v428, %v429
    %436 = vadd.xlane.f32.xlu0 %v435
    %v437 = vpop.xlane.xlu0 %436
    %v438 = vadd.f32 %v437, %v433
    %v439 = vlaneseq
    %v440 = vand.u32 %v439, 127
    %vm441 = vcmp.lt.s32.totalorder %v440, 64
    %v442 = vsel %vm441, %v414, %v434
    %443 = vst [vmem:[#allocation11] sm:$0xff] %v442
    %v444 = vsel %vm441, %v428, %v438
    %445 = vst [vmem:[#allocation11 + $0x8] sm:$0xff] %v444
    // Predicated region
    $region38: #{tpu_custom_call.1} parent=1 // pred_check
      _
    $region39: #{tpu_custom_call.1} parent=1 // pred_check_branch
      %447 = sbr.rel (0) target = $region41
    $region40: #{tpu_custom_call.1} parent=1 // pred_region
      %449 = vsyncadd [#allocation5], 0
      %s450 = sshll.u32 [#allocation11], 4
      %s451 = int_to_ptr.vmem [resolvable:$true] %s450
      %s452 = sshll.u32 %s5, 4
      %s453 = int_to_ptr.hbm [resolvable:$true] %s452
      %458 = dma.vmem_to_hbm [thread:$0]  %s451, 256, %s453, [#allocation5], 128, 128, 8
    $region41: #{tpu_custom_call.1} parent=1 // pred_fallthru
      _
    // Predicated region
    $region42: #{tpu_custom_call.1} parent=1 // pred_check
      _
    $region43: #{tpu_custom_call.1} parent=1 // pred_check_branch
      %460 = sbr.rel (0) target = $region45
    $region44: #{tpu_custom_call.1} parent=1 // pred_region
      %462 = dma.done [#allocation5], 256
    $region45: #{tpu_custom_call.1} parent=1 // pred_fallthru
      _
    %463 = vsyncpa [#allocation4], 1
    %464 = vsyncpa [#allocation7], 1
    %465 = vsyncpa [#allocation10], 1
    %466 = vsyncpa [#allocation5], 1

</llo_original>
